<compile_context>
chip_gen: v6e
topology: v6e:2x2x1
jax: 0.10.0
libtpu: 0.0.40
codegen_flags: <defaults>
</compile_context>

<pallas_src>
import functools

import jax
import jax.numpy as jnp
from jax.experimental import pallas as pl
from jax.experimental.pallas import tpu as pltpu


def _graph_conv_kernel(a_ref, feat_ref, wt_ref, b_ref, out_ref, *, project_first):
    # a_ref:    (bt, n, n)        symmetrized adjacency, already * 0.5, MXU dtype
    # feat_ref: (bt, n, in_dim)   MXU dtype
    # wt_ref:   (in_dim, out_p)   pre-transposed weight, MXU dtype, lane-padded
    # b_ref:    (1, out_p)        f32 bias, lane-padded
    # out_ref:  (bt, n, out_p)
    a = a_ref[...]
    feat = feat_ref[...]
    bt, n, in_dim = feat.shape
    out_p = wt_ref.shape[1]

    if project_first:
        # out = a @ (feat @ Wt) + feat @ Wt + b   (associativity; out_p < in_dim)
        p = jnp.dot(feat.reshape(bt * n, in_dim), wt_ref[...],
                    preferred_element_type=jnp.float32)              # MXU, f32 acc
        p = p.reshape(bt, n, out_p)
        msg = jnp.einsum("bij,bjd->bid", a, p.astype(a.dtype),
                         preferred_element_type=jnp.float32)         # MXU
        out = msg + p + b_ref[...]
    else:
        # out = (a @ feat + feat) @ Wt + b
        msg = jnp.einsum("bij,bjd->bid", a, feat,
                         preferred_element_type=jnp.float32)          # MXU
        msg = msg + feat.astype(jnp.float32)
        out = jnp.dot(msg.astype(wt_ref.dtype).reshape(bt * n, in_dim),
                      wt_ref[...], preferred_element_type=jnp.float32)  # MXU
        out = (out + b_ref[...]).reshape(bt, n, out_p)
    out_ref[...] = out.astype(out_ref.dtype)


def _graph_conv_identity_kernel(a_ref, feat_ref, out_ref):
    # identity_proj=True path: out = (adj/2 + I) @ feat == a @ feat + feat
    # (output keeps in_dim lanes; padding feat to 128 lanes would make stores
    #  unmasked but costs 4x feat DMA, so it is intentionally not done here.)
    msg = jnp.einsum("bij,bjd->bid", a_ref[...], feat_ref[...],
                     preferred_element_type=jnp.float32)
    out_ref[...] = (msg + feat_ref[...].astype(jnp.float32)).astype(out_ref.dtype)


def _round_up(x, m):
    return -(-x // m) * m


def _pick_b_tile(bs, n, edge_itemsize, b_tile=None):
    """Graphs per grid step: aim for ~512 rows in the projection matmul while
    keeping the double-buffered edges block <= ~4 MiB (fits v7x VMEM), and keep
    the batch grid at >= 2 steps so both v7x TensorCores get work."""
    if b_tile is None:
        target_rows = 512
        max_edge_block_bytes = 4 * 1024 * 1024
        b_tile = max(1, min(bs, target_rows // max(n, 1)))
        while b_tile > 1 and b_tile * n * n * edge_itemsize > max_edge_block_bytes:
            b_tile -= 1
        if bs >= 2:
            b_tile = min(b_tile, max(1, bs // 2))
    return max(1, min(int(b_tile), bs))


def graph_conv(edges, feat, weight=None, bias=None, *, b_tile=None,
               mxu_dtype=jnp.bfloat16):
    """edges: [bs, n, n], feat: [bs, n, in_dim].
    weight: [out_dim, in_dim] (nn.Linear layout), bias: [out_dim]; pass both as
    None for the identity_proj=True path.  Returns [bs, n, out_dim] in feat's
    dtype.  Matmul operands are fed to the MXU in `mxu_dtype` (bf16 by default)
    with f32 accumulation; pass mxu_dtype=jnp.float32 for bit-faithful math."""
    bs, n, _ = edges.shape
    in_dim = feat.shape[-1]
    identity_proj = weight is None
    out_dim = in_dim if identity_proj else weight.shape[0]
    out_dtype = feat.dtype

    # Symmetrize + scale the adjacency once in the wrapper, fused with the MXU
    # dtype cast (one XLA pass); removes the per-step in-kernel transpose.
    a_sym = ((edges + jnp.swapaxes(edges, 1, 2)) * 0.5).astype(mxu_dtype)
    feat_c = feat.astype(mxu_dtype)

    # Pad n to a multiple of 16 (bf16 sublane tile; also covers f32's 8) so the
    # in-kernel reshapes are layout-preserving.  Padded rows/cols are zero and
    # only touch output rows that are sliced off below.
    n_p = _round_up(n, 16)
    if n_p != n:
        a_sym = jnp.pad(a_sym, ((0, 0), (0, n_p - n), (0, n_p - n)))
        feat_c = jnp.pad(feat_c, ((0, 0), (0, n_p - n), (0, 0)))

    esize = jnp.dtype(mxu_dtype).itemsize
    bt = _pick_b_tile(bs, n_p, esize, b_tile)
    grid = (pl.cdiv(bs, bt),)   # ragged last batch block handled by Pallas masking

    if identity_proj:
        out_p = out_dim
        project_first = False
    else:
        # Lane-dense output: pad W^T / bias / out to a multiple of 128 lanes so
        # the per-step output stores are unmasked vst; sliced back below.
        out_p = _round_up(out_dim, 128)
        weight_t = weight.T.astype(mxu_dtype)            # (in_dim, out_dim)
        bias2d = bias.reshape(1, out_dim).astype(jnp.float32)
        if out_p != out_dim:
            weight_t = jnp.pad(weight_t, ((0, 0), (0, out_p - out_dim)))
            bias2d = jnp.pad(bias2d, ((0, 0), (0, out_p - out_dim)))
        project_first = out_p < in_dim  # fewer message-pass FLOPs / smaller temps

    # VMEM budget: double-buffered pipelined blocks + params + in-kernel f32
    # temporaries; clamped to 48 MiB so it also fits v7x (64 MiB physical).
    osize = jnp.dtype(out_dtype).itemsize
    edges_blk = bt * n_p * n_p * esize
    feat_blk = bt * n_p * in_dim * esize
    out_blk = bt * n_p * out_p * osize
    param_blk = 0 if identity_proj else (in_dim * out_p * esize + out_p * 4)
    temp_blk = 3 * bt * n_p * max(in_dim, out_p) * 4      # f32 msg / proj slabs
    vmem_limit = int(2 * (edges_blk + feat_blk + out_blk + param_blk)
                     + temp_blk + (4 << 20))
    vmem_limit = min(max(vmem_limit, 16 << 20), 48 << 20)

    compiler_params = pltpu.CompilerParams(
        dimension_semantics=("parallel",),
        vmem_limit_bytes=vmem_limit,
    )
    edges_spec = pl.BlockSpec((bt, n_p, n_p), lambda b: (b, 0, 0))
    feat_spec = pl.BlockSpec((bt, n_p, in_dim), lambda b: (b, 0, 0))
    out_spec = pl.BlockSpec((bt, n_p, out_p), lambda b: (b, 0, 0))
    out_shape = jax.ShapeDtypeStruct((bs, n_p, out_p), out_dtype)

    if identity_proj:
        out = pl.pallas_call(
            _graph_conv_identity_kernel,
            out_shape=out_shape,
            grid_spec=pltpu.PrefetchScalarGridSpec(
                num_scalar_prefetch=0,
                grid=grid,
                in_specs=[edges_spec, feat_spec],
                out_specs=out_spec),
            compiler_params=compiler_params,
        )(a_sym, feat_c)
    else:
        kernel = functools.partial(_graph_conv_kernel, project_first=project_first)
        out = pl.pallas_call(
            kernel,
            out_shape=out_shape,
            grid_spec=pltpu.PrefetchScalarGridSpec(
                num_scalar_prefetch=0,
                grid=grid,
                in_specs=[
                    edges_spec,
                    feat_spec,
                    pl.BlockSpec((in_dim, out_p), lambda b: (0, 0)),
                    pl.BlockSpec((1, out_p), lambda b: (0, 0)),
                ],
                out_specs=out_spec),
            compiler_params=compiler_params,
        )(a_sym, feat_c, weight_t, bias2d)

    if n_p != n or out_p != out_dim:
        out = out[:, :n, :out_dim]
    return out


def init_params(key, in_dim, out_dim):
    """Matches GraphConv._reset_parameters: xavier_uniform_ on weight
    (shape [out_dim, in_dim], nn.Linear layout), normal_ on bias."""
    kw, kb = jax.random.split(key)
    bound = (6.0 / (in_dim + out_dim)) ** 0.5
    weight = jax.random.uniform(kw, (out_dim, in_dim), jnp.float32,
                                minval=-bound, maxval=bound)
    bias = jax.random.normal(kb, (out_dim,), jnp.float32)
    return weight, bias


def _reference(edges, feat, weight=None, bias=None, quant_dtype=None):
    """Plain-JAX reference of the PyTorch forward.  With quant_dtype set, the
    MXU operands are quantized the same way the kernel wrapper does, so the
    comparison isolates kernel correctness from bf16 input rounding."""
    a = (edges + jnp.swapaxes(edges, 1, 2)) * 0.5
    f = feat
    if quant_dtype is not None:
        a = a.astype(quant_dtype).astype(jnp.float32)
        f = f.astype(quant_dtype).astype(jnp.float32)
    msg = jnp.einsum("bij,bjd->bid", a, f) + f
    if weight is None:
        return msg
    w = weight
    if quant_dtype is not None:
        w = w.astype(quant_dtype).astype(jnp.float32)
    return msg @ w.T + bias


if __name__ == "__main__":
    key = jax.random.PRNGKey(0)
    k_edges, k_feat, k_p1, k_p2 = jax.random.split(key, 4)

    bs, n = 4, 16
    edges = jax.random.uniform(k_edges, (bs, n, n), jnp.float32)

    # --- case 1: square projection (out_dim == in_dim), message-pass first ---
    in_dim = out_dim = 32
    feat = jax.random.normal(k_feat, (bs, n, in_dim), jnp.float32)
    weight, bias = init_params(k_p1, in_dim, out_dim)
    ref = _reference(edges, feat, weight, bias)

    # f32 MXU path: bit-faithful to the PyTorch forward -> tight tolerance.
    out_f32 = jax.block_until_ready(
        graph_conv(edges, feat, weight, bias, mxu_dtype=jnp.float32))
    assert out_f32.shape == (bs, n, out_dim)
    assert jnp.allclose(out_f32, ref, atol=1e-4, rtol=1e-4)

    # bf16 MXU path (default / fast): compare against a reference with the same
    # bf16 input quantization; tolerance loosened for the in-kernel msg recast.
    out_bf16 = jax.block_until_ready(graph_conv(edges, feat, weight, bias))
    ref_q = _reference(edges, feat, weight, bias, quant_dtype=jnp.bfloat16)
    assert jnp.allclose(out_bf16, ref_q, atol=1.5e-1, rtol=5e-2)
    assert jnp.allclose(out_bf16, ref, atol=5e-1, rtol=1e-1)  # semantic sanity

    # --- case 2: out_dim < in_dim exercises the project-first ordering ---
    in_dim2, out_dim2 = 256, 64
    feat2 = jax.random.normal(k_feat, (bs, n, in_dim2), jnp.float32)
    weight2, bias2 = init_params(k_p2, in_dim2, out_dim2)
    out2 = jax.block_until_ready(graph_conv(edges, feat2, weight2, bias2))
    ref2_q = _reference(edges, feat2, weight2, bias2, quant_dtype=jnp.bfloat16)
    assert out2.shape == (bs, n, out_dim2)
    assert jnp.allclose(out2, ref2_q, atol=1.5e-1, rtol=5e-2)

    # --- identity_proj=True path (self.linear == nn.Identity) ---
    out_id = jax.block_until_ready(graph_conv(edges, feat))
    ref_id_q = _reference(edges, feat, quant_dtype=jnp.bfloat16)
    assert out_id.shape == (bs, n, in_dim)
    assert jnp.allclose(out_id, ref_id_q, atol=2e-2, rtol=2e-2)

    print("KERNEL_OK")
</pallas_src>

<mosaic_0001>
module attributes {stable_mosaic.version = 11 : i64} {
  func.func @_graph_conv_kernel(%arg0: i32, %arg1: memref<2x16x16xf32, #tpu.memory_space<vmem>>, %arg2: memref<2x16x32xf32, #tpu.memory_space<vmem>>, %arg3: memref<32x128xf32, #tpu.memory_space<vmem>>, %arg4: memref<1x128xf32, #tpu.memory_space<vmem>>, %arg5: memref<2x16x128xf32, #tpu.memory_space<vmem>>) attributes {dimension_semantics = [#tpu.dimension_semantics<parallel>], iteration_bounds = array<i64: 2>, scalar_prefetch = 0 : i64, scratch_operands = 0 : i64, tpu.core_type = #tpu.core_type<tc>, window_params = [{transform_indices = @transform_0, window_bounds = array<i64: 2, 16, 16>}, {transform_indices = @transform_1, window_bounds = array<i64: 2, 16, 32>}, {pipeline_mode = #tpu.pipeline_mode<synchronous>, transform_indices = @transform_2, window_bounds = array<i64: 32, 128>}, {pipeline_mode = #tpu.pipeline_mode<synchronous>, transform_indices = @transform_3, window_bounds = array<i64: 1, 128>}, {transform_indices = @transform_4, window_bounds = array<i64: 2, 16, 128>}]} {
    %c0 = arith.constant 0 : index
    %c0_0 = arith.constant 0 : index
    %c0_1 = arith.constant 0 : index
    %0 = vector.load %arg1[%c0, %c0_0, %c0_1] : memref<2x16x16xf32, #tpu.memory_space<vmem>>, vector<2x16x16xf32>
    %c0_2 = arith.constant 0 : index
    %c0_3 = arith.constant 0 : index
    %c0_4 = arith.constant 0 : index
    %1 = vector.load %arg2[%c0_2, %c0_3, %c0_4] : memref<2x16x32xf32, #tpu.memory_space<vmem>>, vector<2x16x32xf32>
    "tpu.trace_start"() <{level = 10 : i32, message = "bij,bjd->bid"}> : () -> ()
    %cst = arith.constant dense<0.000000e+00> : vector<2x16x32xf32>
    %2 = tpu.matmul %0, %1, %cst {dimension_numbers = #tpu.dot_dimension_numbers<[2], [1], [1], [2], [0, 0, 0, 1, 1, 2], [0], [0]>} : vector<2x16x16xf32>, vector<2x16x32xf32>, vector<2x16x32xf32> -> vector<2x16x32xf32>
    "tpu.trace_stop"() : () -> ()
    %3 = arith.addf %2, %1 : vector<2x16x32xf32>
    %4 = vector.shape_cast %3 : vector<2x16x32xf32> to vector<32x32xf32>
    %c0_5 = arith.constant 0 : index
    %c0_6 = arith.constant 0 : index
    %5 = vector.load %arg3[%c0_5, %c0_6] : memref<32x128xf32, #tpu.memory_space<vmem>>, vector<32x128xf32>
    %cst_7 = arith.constant dense<0.000000e+00> : vector<32x128xf32>
    %6 = tpu.matmul %4, %5, %cst_7 {dimension_numbers = #tpu.dot_dimension_numbers<[1], [0], [0], [1], [0, 0, 1, 1], [], []>} : vector<32x32xf32>, vector<32x128xf32>, vector<32x128xf32> -> vector<32x128xf32>
    %c0_8 = arith.constant 0 : index
    %c0_9 = arith.constant 0 : index
    %7 = vector.load %arg4[%c0_8, %c0_9] : memref<1x128xf32, #tpu.memory_space<vmem>>, vector<1x128xf32>
    %8 = vector.broadcast %7 : vector<1x128xf32> to vector<32x128xf32>
    %9 = arith.addf %6, %8 : vector<32x128xf32>
    %10 = vector.shape_cast %9 : vector<32x128xf32> to vector<2x16x128xf32>
    %c0_10 = arith.constant 0 : index
    %c0_11 = arith.constant 0 : index
    %c0_12 = arith.constant 0 : index
    %11 = vector.load %arg5[%c0_10, %c0_11, %c0_12] : memref<2x16x128xf32, #tpu.memory_space<vmem>>, vector<2x16x128xf32>
    tpu.vector_store %arg5[%c0_10, %c0_11, %c0_12], %10 {strides = array<i32>} : memref<2x16x128xf32, #tpu.memory_space<vmem>>, vector<2x16x128xf32>,
    return
  }
  func.func @transform_0(%arg0: i32) -> (i32, i32, i32) {
    %c0_i32 = arith.constant 0 : i32
    %c0_i32_0 = arith.constant 0 : i32
    %c0_i32_1 = arith.constant 0 : i32
    return %arg0, %c0_i32, %c0_i32_0 : i32, i32, i32
  }
  func.func @transform_1(%arg0: i32) -> (i32, i32, i32) {
    %c0_i32 = arith.constant 0 : i32
    %c0_i32_0 = arith.constant 0 : i32
    %c0_i32_1 = arith.constant 0 : i32
    return %arg0, %c0_i32, %c0_i32_0 : i32, i32, i32
  }
  func.func @transform_2(%arg0: i32) -> (i32, i32) {
    %c0_i32 = arith.constant 0 : i32
    %c0_i32_0 = arith.constant 0 : i32
    %c0_i32_1 = arith.constant 0 : i32
    return %c0_i32, %c0_i32_0 : i32, i32
  }
  func.func @transform_3(%arg0: i32) -> (i32, i32) {
    %c0_i32 = arith.constant 0 : i32
    %c0_i32_0 = arith.constant 0 : i32
    %c0_i32_1 = arith.constant 0 : i32
    return %c0_i32, %c0_i32_0 : i32, i32
  }
  func.func @transform_4(%arg0: i32) -> (i32, i32, i32) {
    %c0_i32 = arith.constant 0 : i32
    %c0_i32_0 = arith.constant 0 : i32
    %c0_i32_1 = arith.constant 0 : i32
    return %arg0, %c0_i32, %c0_i32_0 : i32, i32, i32
  }
}

</mosaic_0001>

<llo_original>
// kernel: tpu_custom_call.1
$region0: #{tpu_custom_call.1}
  #allocation0 [shape = 'u32[]', space=smem, size = 0x4, offset = 0x4, fixed_abs, tag = 'smem constant byte address 0x4 - core index']
  #allocation1 [shape = 'u32[144,128]{1,0:T(1,128)}', space=vmem, size = 0x12000, scoped, tag = 'internal scratch']
  %s0 = inlined_call_operand.hbm [shape: f32[4,16,16], index: 0, kind: input, shape index: {}]
  %s1 = inlined_call_operand.hbm [shape: f32[4,16,32], index: 1, kind: input, shape index: {}]
  %s2 = inlined_call_operand.hbm [shape: f32[32,128], index: 2, kind: input, shape index: {}]
  %s3 = inlined_call_operand.vmem [shape: f32[1,128], index: 3, kind: input, shape index: {}]
  %s4 = inlined_call_operand.hbm [shape: f32[4,16,128], index: 4, kind: output, shape index: {}]
  %s5 = sld [smem:[#allocation0]]
  $region61: #{tpu_custom_call.1} parent=0
    _
  %s7 = ssub.s32 1, %s5
  %s8 = scalar_select 0, %s7, %s5
  $region1: #{tpu_custom_call.1} parent=0
    #allocation2 [shape = 'u8[32768]{0}', space=vmem, size = 0x8000, scoped, tag = 'input window, operand 0']
    #allocation3 [shape = 's32[2]{0}', space=sflag, size = 0x8, scoped, tag = 'scoped memory for tpu_custom_call.1']
    #allocation4 [shape = 's32[2]{0}', space=sflag, size = 0x8, scoped, tag = 'scoped memory for tpu_custom_call.1']
    #allocation5 [shape = 'u8[32768]{0}', space=vmem, size = 0x8000, scoped, tag = 'input window, operand 1']
    #allocation6 [shape = 's32[2]{0}', space=sflag, size = 0x8, scoped, tag = 'scoped memory for tpu_custom_call.1']
    #allocation7 [shape = 'u8[16384]{0}', space=vmem, size = 0x4000, scoped, tag = 'input window, operand 2, single buffered']
    #allocation8 [shape = 'u8[32768]{0}', space=vmem, size = 0x8000, scoped, tag = 'output window, operand 0']
    %9 = vsyncpa [#allocation3], 0
    %s10 = scalar_lea.sflag [#allocation3], 1
    %11 = vsyncpa %s10, 0
    %12 = vsyncpa [#allocation6], 0
    %s13 = scalar_lea.sflag [#allocation6], 1
    %14 = vsyncpa %s13, 0
    %15 = vsyncpa [#allocation4], 0
    %s16 = scalar_lea.sflag [#allocation4], 1
    %17 = vsyncpa %s16, 0
    loop: start=0, step=1, limit=4
    $region2: #{tpu_custom_call.1} parent=1 // loop_pre_header
      _
    $region3: #{tpu_custom_call.1} parent=1 // loop_header
      %s19 = sphi 0, %s23
      %p20 = scmp.ge.s32.totalorder %s19, 4
      %s29 = sphi 0, %s31
      %s32 = sphi 0, %s29
      %s33 = sphi 0, %s32
      %s49 = sphi 0, %s33
      %s55 = sphi 0, %s57
      %s58 = sphi 0, %s55
      %s59 = sphi 0, %s58
      %s75 = sphi 0, %s59
      %s79 = sphi 0, %s79
      %s81 = sphi 0, %s79
      %s82 = sphi 0, %s81
      %s96 = sphi 0, %s82
      %s100 = sphi 0, %s100
      %s102 = sphi 0, %s100
      %s103 = sphi 0, %s102
      %s117 = sphi 0, %s103
      %s123 = sphi 0, %s125
      %s126 = sphi 0, %s123
      %s127 = sphi 0, %s126
      %s143 = sphi 0, %s127
    $region4: #{tpu_custom_call.1} parent=1 // loop_header_branch
      %22 = sbr.rel (%p20) target = $region8
    $region5: #{tpu_custom_call.1} parent=1 // loop_body
      %s24 = ssub.s32 %s19, 1
      %s25 = ssub.s32 %s19, 2
      %s26 = sadd.s32 %s19, 1
      %s27 = ssub.s32 %s19, %s26
      %p28 = scmp.eq.s32.totalorder %s27, 0
      %s30 = sadd.s32 %s29, 1
      %s31 = scalar_select %p28, %s29, %s30
      %p34 = pneg %p28
      %p35 = scmp.eq.s32.totalorder %s19, 1
      %p36 = por %p34, %p35
      %p37 = scmp.ne.s32.totalorder %s29, %s32
      %p38 = scmp.eq.s32.totalorder %s19, 0
      %p39 = por %p37, %p38
      %p40 = scmp.ne.s32.totalorder %s29, %s32
      %p41 = scmp.eq.s32.totalorder %s24, 1
      %p42 = por %p40, %p41
      %p43 = scmp.ne.s32.totalorder %s32, %s33
      %p44 = scmp.eq.s32.totalorder %s24, 0
      %p45 = por %p43, %p44
      %p46 = scmp.ne.s32.totalorder %s32, %s33
      %p47 = scmp.eq.s32.totalorder %s25, 1
      %p48 = por %p46, %p47
      %p50 = scmp.ne.s32.totalorder %s33, %s49
      %p51 = scmp.eq.s32.totalorder %s25, 0
      %p52 = por %p50, %p51
      %s53 = ssub.s32 %s19, %s26
      %p54 = scmp.eq.s32.totalorder %s53, 0
      %s56 = sadd.s32 %s55, 1
      %s57 = scalar_select %p54, %s55, %s56
      %p60 = pneg %p54
      %p61 = scmp.eq.s32.totalorder %s19, 1
      %p62 = por %p60, %p61
      %p63 = scmp.ne.s32.totalorder %s55, %s58
      %p64 = scmp.eq.s32.totalorder %s19, 0
      %p65 = por %p63, %p64
      %p66 = scmp.ne.s32.totalorder %s55, %s58
      %p67 = scmp.eq.s32.totalorder %s24, 1
      %p68 = por %p66, %p67
      %p69 = scmp.ne.s32.totalorder %s58, %s59
      %p70 = scmp.eq.s32.totalorder %s24, 0
      %p71 = por %p69, %p70
      %p72 = scmp.ne.s32.totalorder %s58, %s59
      %p73 = scmp.eq.s32.totalorder %s25, 1
      %p74 = por %p72, %p73
      %p76 = scmp.ne.s32.totalorder %s59, %s75
      %p77 = scmp.eq.s32.totalorder %s25, 0
      %p78 = por %p76, %p77
      %s80 = sadd.s32 %s79, 1
      %p83 = scmp.eq.s32.totalorder %s19, 1
      %p84 = scmp.ne.s32.totalorder %s79, %s81
      %p85 = scmp.eq.s32.totalorder %s19, 0
      %p86 = por %p84, %p85
      %p87 = scmp.ne.s32.totalorder %s79, %s81
      %p88 = scmp.eq.s32.totalorder %s24, 1
      %p89 = por %p87, %p88
      %p90 = scmp.ne.s32.totalorder %s81, %s82
      %p91 = scmp.eq.s32.totalorder %s24, 0
      %p92 = por %p90, %p91
      %p93 = scmp.ne.s32.totalorder %s81, %s82
      %p94 = scmp.eq.s32.totalorder %s25, 1
      %p95 = por %p93, %p94
      %p97 = scmp.ne.s32.totalorder %s82, %s96
      %p98 = scmp.eq.s32.totalorder %s25, 0
      %p99 = por %p97, %p98
      %s101 = sadd.s32 %s100, 1
      %p104 = scmp.eq.s32.totalorder %s19, 1
      %p105 = scmp.ne.s32.totalorder %s100, %s102
      %p106 = scmp.eq.s32.totalorder %s19, 0
      %p107 = por %p105, %p106
      %p108 = scmp.ne.s32.totalorder %s100, %s102
      %p109 = scmp.eq.s32.totalorder %s24, 1
      %p110 = por %p108, %p109
      %p111 = scmp.ne.s32.totalorder %s102, %s103
      %p112 = scmp.eq.s32.totalorder %s24, 0
      %p113 = por %p111, %p112
      %p114 = scmp.ne.s32.totalorder %s102, %s103
      %p115 = scmp.eq.s32.totalorder %s25, 1
      %p116 = por %p114, %p115
      %p118 = scmp.ne.s32.totalorder %s103, %s117
      %p119 = scmp.eq.s32.totalorder %s25, 0
      %p120 = por %p118, %p119
      %s121 = ssub.s32 %s19, %s26
      %p122 = scmp.eq.s32.totalorder %s121, 0
      %s124 = sadd.s32 %s123, 1
      %s125 = scalar_select %p122, %s123, %s124
      %p128 = pneg %p122
      %p129 = scmp.eq.s32.totalorder %s19, 1
      %p130 = por %p128, %p129
      %p131 = scmp.ne.s32.totalorder %s123, %s126
      %p132 = scmp.eq.s32.totalorder %s19, 0
      %p133 = por %p131, %p132
      %p134 = scmp.ne.s32.totalorder %s123, %s126
      %p135 = scmp.eq.s32.totalorder %s24, 1
      %p136 = por %p134, %p135
      %p137 = scmp.ne.s32.totalorder %s126, %s127
      %p138 = scmp.eq.s32.totalorder %s24, 0
      %p139 = por %p137, %p138
      %p140 = scmp.ne.s32.totalorder %s126, %s127
      %p141 = scmp.eq.s32.totalorder %s25, 1
      %p142 = por %p140, %p141
      %p144 = scmp.ne.s32.totalorder %s127, %s143
      %p145 = scmp.eq.s32.totalorder %s25, 0
      %p146 = por %p144, %p145
      %p147 = scmp.le.s32.totalorder 1, %s19
      %p148 = scmp.lt.s32.totalorder %s19, 3
      %p149 = pnand %p147, %p148
      %p150 = pneg %p149
      // Predicated region
      $region9: #{tpu_custom_call.1} parent=5 // pred_check
        _
      $region10: #{tpu_custom_call.1} parent=5 // pred_check_branch
        %152 = sbr.rel (%p149) target = $region12
      $region11: #{tpu_custom_call.1} parent=5 // pred_region
        %s153 = ssub.s32 %s19, 1
        // Predicated region
        $region13: #{tpu_custom_call.1} parent=11 // pred_check
          %p154 = pneg %p92
        $region14: #{tpu_custom_call.1} parent=11 // pred_check_branch
          %156 = sbr.rel (%p154) target = $region16
        $region15: #{tpu_custom_call.1} parent=11 // pred_region
          %s158 = ssub.s32 512, 512
          %159 = vsyncadd [#allocation6], %s158
          %s160 = sshll.u32 [#allocation7], 4
          %s161 = int_to_ptr.vmem [resolvable:$true] %s160
          %166 = dma.hbm_to_vmem [thread:$0]  %s2, 512, %s161, [#allocation6], 128, 128, 8
        $region16: #{tpu_custom_call.1} parent=11 // pred_fallthru
          _
        // Predicated region
        $region17: #{tpu_custom_call.1} parent=11 // pred_check
          %p167 = pneg %p113
        $region18: #{tpu_custom_call.1} parent=11 // pred_check_branch
          %169 = sbr.rel (%p167) target = $region20
        $region19: #{tpu_custom_call.1} parent=11 // pred_region
          _
        $region20: #{tpu_custom_call.1} parent=11 // pred_fallthru
          _
      $region12: #{tpu_custom_call.1} parent=5 // pred_fallthru
        _
      %p170 = scmp.lt.s32.totalorder %s19, 2
      // Predicated region
      $region21: #{tpu_custom_call.1} parent=5 // pred_check
        %p171 = pneg %p170
      $region22: #{tpu_custom_call.1} parent=5 // pred_check_branch
        %173 = sbr.rel (%p171) target = $region24
      $region23: #{tpu_custom_call.1} parent=5 // pred_region
        // Predicated region
        $region25: #{tpu_custom_call.1} parent=23 // pred_check
          %p174 = pneg %p39
        $region26: #{tpu_custom_call.1} parent=23 // pred_check_branch
          %176 = sbr.rel (%p174) target = $region28
        $region27: #{tpu_custom_call.1} parent=23 // pred_region
          %s177 = sand.u32 %s29, 1
          %s178 = scalar_lea.sflag [#allocation3], %s177
          %s179 = sand.u32 %s29, 1
          %s180 = smul.addr %s179, 32
          %s181 = scalar_lea.vmem [#allocation2], %s180
          %s182 = smul.u32 2, %s19
          %s184 = ssub.s32 512, 512
          %185 = vsyncadd %s178, %s184
          %s186 = smul.addr %s182, 2
          %s187 = smul.addr %s186, 128
          %s188 = scalar_lea.hbm %s0, %s187
          %s189 = sshll.u32 %s181, 4
          %s190 = int_to_ptr.vmem [resolvable:$true] %s189
          %195 = dma.hbm_to_vmem [thread:$0]  %s188, 512, %s190, %s178, 128, 128, 8
        $region28: #{tpu_custom_call.1} parent=23 // pred_fallthru
          _
        // Predicated region
        $region29: #{tpu_custom_call.1} parent=23 // pred_check
          %p196 = pneg %p65
        $region30: #{tpu_custom_call.1} parent=23 // pred_check_branch
          %198 = sbr.rel (%p196) target = $region32
        $region31: #{tpu_custom_call.1} parent=23 // pred_region
          %s199 = sand.u32 %s19, 1
          %s200 = scalar_lea.sflag [#allocation6], %s199
          %s201 = sand.u32 %s55, 1
          %s202 = smul.addr %s201, 32
          %s203 = scalar_lea.vmem [#allocation5], %s202
          %s204 = smul.u32 2, %s19
          %s206 = ssub.s32 512, 512
          %207 = vsyncadd %s200, %s206
          %s208 = smul.addr %s204, 2
          %s209 = smul.addr %s208, 128
          %s210 = scalar_lea.hbm %s1, %s209
          %s211 = sshll.u32 %s203, 4
          %s212 = int_to_ptr.vmem [resolvable:$true] %s211
          %217 = dma.hbm_to_vmem [thread:$0]  %s210, 512, %s212, %s200, 128, 128, 8
        $region32: #{tpu_custom_call.1} parent=23 // pred_fallthru
          _
      $region24: #{tpu_custom_call.1} parent=5 // pred_fallthru
        _
      %p218 = scmp.le.s32.totalorder 1, %s19
      %p219 = scmp.lt.s32.totalorder %s19, 3
      %p220 = pnand %p218, %p219
      %p221 = pneg %p220
      // Predicated region
      $region33: #{tpu_custom_call.1} parent=5 // pred_check
        _
      $region34: #{tpu_custom_call.1} parent=5 // pred_check_branch
        %223 = sbr.rel (%p220) target = $region36
      $region35: #{tpu_custom_call.1} parent=5 // pred_region
        %s224 = ssub.s32 %s19, 1
        %s225 = sand.u32 %s32, 1
        %s226 = scalar_lea.sflag [#allocation3], %s225
        %s227 = sand.u32 %s32, 1
        %s228 = smul.addr %s227, 32
        %s229 = scalar_lea.vmem [#allocation2], %s228
        // Predicated region
        $region37: #{tpu_custom_call.1} parent=35 // pred_check
          %p230 = pneg %p45
        $region38: #{tpu_custom_call.1} parent=35 // pred_check_branch
          %232 = sbr.rel (%p230) target = $region40
        $region39: #{tpu_custom_call.1} parent=35 // pred_region
          %233 = dma.done %s226, 512
        $region40: #{tpu_custom_call.1} parent=35 // pred_fallthru
          _
        %s234 = sand.u32 %s24, 1
        %s235 = scalar_lea.sflag [#allocation6], %s234
        %s236 = sand.u32 %s58, 1
        %s237 = smul.addr %s236, 32
        %s238 = scalar_lea.vmem [#allocation5], %s237
        // Predicated region
        $region41: #{tpu_custom_call.1} parent=35 // pred_check
          %p239 = pneg %p71
        $region42: #{tpu_custom_call.1} parent=35 // pred_check_branch
          %241 = sbr.rel (%p239) target = $region44
        $region43: #{tpu_custom_call.1} parent=35 // pred_region
          %242 = dma.done %s235, 512
        $region44: #{tpu_custom_call.1} parent=35 // pred_fallthru
          _
        // Predicated region
        $region45: #{tpu_custom_call.1} parent=35 // pred_check
          %p243 = pneg %p92
        $region46: #{tpu_custom_call.1} parent=35 // pred_check_branch
          %245 = sbr.rel (%p243) target = $region48
        $region47: #{tpu_custom_call.1} parent=35 // pred_region
          %246 = dma.done [#allocation6], 512
        $region48: #{tpu_custom_call.1} parent=35 // pred_fallthru
          _
        %s247 = sand.u32 %s32, 1
        %s248 = scalar_lea.sflag [#allocation3], %s247
        %s249 = sand.u32 %s32, 1
        %s250 = smul.addr %s249, 32
        %s251 = scalar_lea.vmem [#allocation2], %s250
        %p252 = pneg %p45
        %p253 = pneg %p42
        %s254 = sand.u32 %s24, 1
        %s255 = scalar_lea.sflag [#allocation6], %s254
        %s256 = sand.u32 %s58, 1
        %s257 = smul.addr %s256, 32
        %s258 = scalar_lea.vmem [#allocation5], %s257
        %p259 = pneg %p71
        %p260 = pneg %p68
        %p261 = pneg %p92
        %p262 = pneg %p89
        %p263 = pneg %p113
        %p264 = pneg %p110
        %p265 = pneg %p139
        %p266 = pneg %p136
        %s267 = sand.u32 %s126, 1
        %s268 = scalar_lea.sflag [#allocation4], %s267
        %s269 = sand.u32 %s126, 1
        %s270 = smul.addr %s269, 32
        %s271 = scalar_lea.vmem [#allocation8], %s270
        %s272 = smul.u32 2, %s24
        %s273 = smul.u32 2, %s24
        %s274 = smul.u32 2, %s24
        %v275 = vld [vmem:[%s229] sm:$0xff]
        %v276 = vld [vmem:[%s229 + $0x8] sm:$0xff]
        %v277 = vld [vmem:[%s229 + $0x10] sm:$0xff]
        %v278 = vld [vmem:[%s229 + $0x18] sm:$0xff]
        %v279 = vld [vmem:[%s238] sm:$0xff]
        %v280 = vld [vmem:[%s238 + $0x8] sm:$0xff]
        %v281 = vld [vmem:[%s238 + $0x10] sm:$0xff]
        %v282 = vld [vmem:[%s238 + $0x18] sm:$0xff]
        %vm283 = vcmask 130048
        %v285 = vsel %vm283, %v275, 0
        %v288 = vsel %vm283, %v276, 0
        %290 = vmatprep.subr.mxu0 0.0
        %291 = vmatpush1.msra.mxu0 0.0
        %292 = vmatprep.subr.mxu0 0.0
        %293 = vmatpush1.msra.mxu0 0.0
        %294 = vmatprep.subr.mxu0 0.0
        %295 = vmatpush1.msra.mxu0 0.0
        %296 = vmatprep.subr.mxu0 0.0
        %297 = vmatpush1.msra.mxu0 0.0
        %298 = vmatprep.subr.mxu0 0.0
        %299 = vmatpush1.msra.mxu0 0.0
        %300 = vmatprep.subr.mxu0 0.0
        %301 = vmatpush1.msra.mxu0 0.0
        %302 = vmatprep.subr.mxu0 0.0
        %303 = vmatpush1.msra.mxu0 0.0
        %304 = vmatprep.subr.mxu0 0.0
        %305 = vmatpush1.msra.mxu0 0.0
        %306 = vmatprep.subr.mxu0 0.0
        %307 = vmatpush1.msra.mxu0 0.0
        %308 = vmatprep.subr.mxu0 0.0
        %309 = vmatpush1.msra.mxu0 0.0
        %310 = vmatprep.subr.mxu0 0.0
        %311 = vmatpush1.msra.mxu0 0.0
        %312 = vmatprep.subr.mxu0 0.0
        %313 = vmatpush1.msra.mxu0 0.0
        %314 = vmatprep.subr.mxu0 0.0
        %315 = vmatpush1.msra.mxu0 0.0
        %316 = vmatprep.subr.mxu0 0.0
        %317 = vmatpush1.msra.mxu0 0.0
        %318 = vmatprep.subr.mxu0 0.0
        %319 = vmatpush1.msra.mxu0 %v280
        %320 = vmatprep.subr.mxu0 0.0
        %321 = vmatpush1.msra.mxu0 %v279
        %322 = vmatprep.subr.mxu0 0.0
        %323 = vmatpush2.msra.mxu0 0.0
        %324 = vmatprep.subr.mxu0 0.0
        %325 = vmatpush2.msra.mxu0 0.0
        %326 = vmatprep.subr.mxu0 0.0
        %327 = vmatpush2.msra.mxu0 0.0
        %328 = vmatprep.subr.mxu0 0.0
        %329 = vmatpush2.msra.mxu0 0.0
        %330 = vmatprep.subr.mxu0 0.0
        %331 = vmatpush2.msra.mxu0 0.0
        %332 = vmatprep.subr.mxu0 0.0
        %333 = vmatpush2.msra.mxu0 0.0
        %334 = vmatprep.subr.mxu0 0.0
        %335 = vmatpush2.msra.mxu0 0.0
        %336 = vmatprep.subr.mxu0 0.0
        %337 = vmatpush2.msra.mxu0 0.0
        %338 = vmatprep.subr.mxu0 0.0
        %339 = vmatpush2.msra.mxu0 0.0
        %340 = vmatprep.subr.mxu0 0.0
        %341 = vmatpush2.msra.mxu0 0.0
        %342 = vmatprep.subr.mxu0 0.0
        %343 = vmatpush2.msra.mxu0 0.0
        %344 = vmatprep.subr.mxu0 0.0
        %345 = vmatpush2.msra.mxu0 0.0
        %346 = vmatprep.subr.mxu0 0.0
        %347 = vmatpush2.msra.mxu0 0.0
        %348 = vmatprep.subr.mxu0 0.0
        %349 = vmatpush2.msra.mxu0 0.0
        %350 = vmatprep.subr.mxu0 0.0
        %351 = vmatpush2.msra.mxu0 0.0
        %352 = vmatprep.subr.mxu0 0.0
        %353 = vmatpush2.msra.mxu0 0.0
        %354 = vmatprep.mubr.f32.mxu0 0.0
        %355 = vmatmul.mubr.f32.gmra.mxu0 %v285
        %v356 = vpop.f32.mrf.mxu0
        %v357 = vadd.f32 %v279, %v356
        %v358 = vpop.f32.mrf.mxu0
        %359 = vmatprep.mubr.f32.mxu0 0.0
        %360 = vmatmul.mubr.f32.gmra.mxu0 %v288
        %v361 = vpop.f32.mrf.mxu0
        %v362 = vadd.f32 %v280, %v361
        %v363 = vpop.f32.mrf.mxu0
        %364 = vdwg.mxu0
        %v366 = vsel %vm283, %v277, 0
        %v369 = vsel %vm283, %v278, 0
        %371 = vmatprep.subr.mxu0 0.0
        %372 = vmatpush1.msra.mxu0 0.0
        %373 = vmatprep.subr.mxu0 0.0
        %374 = vmatpush1.msra.mxu0 0.0
        %375 = vmatprep.subr.mxu0 0.0
        %376 = vmatpush1.msra.mxu0 0.0
        %377 = vmatprep.subr.mxu0 0.0
        %378 = vmatpush1.msra.mxu0 0.0
        %379 = vmatprep.subr.mxu0 0.0
        %380 = vmatpush1.msra.mxu0 0.0
        %381 = vmatprep.subr.mxu0 0.0
        %382 = vmatpush1.msra.mxu0 0.0
        %383 = vmatprep.subr.mxu0 0.0
        %384 = vmatpush1.msra.mxu0 0.0
        %385 = vmatprep.subr.mxu0 0.0
        %386 = vmatpush1.msra.mxu0 0.0
        %387 = vmatprep.subr.mxu0 0.0
        %388 = vmatpush1.msra.mxu0 0.0
        %389 = vmatprep.subr.mxu0 0.0
        %390 = vmatpush1.msra.mxu0 0.0
        %391 = vmatprep.subr.mxu0 0.0
        %392 = vmatpush1.msra.mxu0 0.0
        %393 = vmatprep.subr.mxu0 0.0
        %394 = vmatpush1.msra.mxu0 0.0
        %395 = vmatprep.subr.mxu0 0.0
        %396 = vmatpush1.msra.mxu0 0.0
        %397 = vmatprep.subr.mxu0 0.0
        %398 = vmatpush1.msra.mxu0 0.0
        %399 = vmatprep.subr.mxu0 0.0
        %400 = vmatpush1.msra.mxu0 %v282
        %401 = vmatprep.subr.mxu0 0.0
        %402 = vmatpush1.msra.mxu0 %v281
        %403 = vmatprep.subr.mxu0 0.0
        %404 = vmatpush2.msra.mxu0 0.0
        %405 = vmatprep.subr.mxu0 0.0
        %406 = vmatpush2.msra.mxu0 0.0
        %407 = vmatprep.subr.mxu0 0.0
        %408 = vmatpush2.msra.mxu0 0.0
        %409 = vmatprep.subr.mxu0 0.0
        %410 = vmatpush2.msra.mxu0 0.0
        %411 = vmatprep.subr.mxu0 0.0
        %412 = vmatpush2.msra.mxu0 0.0
        %413 = vmatprep.subr.mxu0 0.0
        %414 = vmatpush2.msra.mxu0 0.0
        %415 = vmatprep.subr.mxu0 0.0
        %416 = vmatpush2.msra.mxu0 0.0
        %417 = vmatprep.subr.mxu0 0.0
        %418 = vmatpush2.msra.mxu0 0.0
        %419 = vmatprep.subr.mxu0 0.0
        %420 = vmatpush2.msra.mxu0 0.0
        %421 = vmatprep.subr.mxu0 0.0
        %422 = vmatpush2.msra.mxu0 0.0
        %423 = vmatprep.subr.mxu0 0.0
        %424 = vmatpush2.msra.mxu0 0.0
        %425 = vmatprep.subr.mxu0 0.0
        %426 = vmatpush2.msra.mxu0 0.0
        %427 = vmatprep.subr.mxu0 0.0
        %428 = vmatpush2.msra.mxu0 0.0
        %429 = vmatprep.subr.mxu0 0.0
        %430 = vmatpush2.msra.mxu0 0.0
        %431 = vmatprep.subr.mxu0 0.0
        %432 = vmatpush2.msra.mxu0 0.0
        %433 = vmatprep.subr.mxu0 0.0
        %434 = vmatpush2.msra.mxu0 0.0
        %435 = vmatprep.mubr.f32.mxu0 0.0
        %436 = vmatmul.mubr.f32.gmra.mxu0 %v366
        %v437 = vpop.f32.mrf.mxu0
        %v438 = vadd.f32 %v281, %v437
        %v439 = vpop.f32.mrf.mxu0
        %440 = vmatprep.mubr.f32.mxu0 0.0
        %441 = vmatmul.mubr.f32.gmra.mxu0 %v369
        %v442 = vpop.f32.mrf.mxu0
        %v443 = vadd.f32 %v282, %v442
        %v444 = vpop.f32.mrf.mxu0
        %445 = vdwg.mxu0
        %v446 = vld [vmem:[#allocation7] sm:$0xff]
        %v447 = vld [vmem:[#allocation7 + $0x8] sm:$0xff]
        %v448 = vld [vmem:[#allocation7 + $0x10] sm:$0xff]
        %v449 = vld [vmem:[#allocation7 + $0x18] sm:$0xff]
        %v450 = vld [vmem:[%s3] sm:$0x1]
        %v452 = vlaneseq
        %v453 = vshrl.u32 %v452, 7
        %v454 = vsub.s32 0, %v453
        %v455 = vrot.slane %v450, %v454
        %vm457 = vcmask 261120
        %v459 = vsel %vm457, %v357, 0
        %v462 = vsel %vm457, %v362, 0
        %v465 = vsel %vm457, %v438, 0
        %v468 = vsel %vm457, %v443, 0
        %470 = vmatprep.subr.mxu0 0.0
        %471 = vmatpush1.msra.mxu0 0.0
        %472 = vmatprep.subr.mxu0 0.0
        %473 = vmatpush1.msra.mxu0 0.0
        %474 = vmatprep.subr.mxu0 0.0
        %475 = vmatpush1.msra.mxu0 0.0
        %476 = vmatprep.subr.mxu0 0.0
        %477 = vmatpush1.msra.mxu0 0.0
        %478 = vmatprep.subr.mxu0 0.0
        %479 = vmatpush1.msra.mxu0 0.0
        %480 = vmatprep.subr.mxu0 0.0
        %481 = vmatpush1.msra.mxu0 0.0
        %482 = vmatprep.subr.mxu0 0.0
        %483 = vmatpush1.msra.mxu0 0.0
        %484 = vmatprep.subr.mxu0 0.0
        %485 = vmatpush1.msra.mxu0 0.0
        %486 = vmatprep.subr.mxu0 0.0
        %487 = vmatpush1.msra.mxu0 0.0
        %488 = vmatprep.subr.mxu0 0.0
        %489 = vmatpush1.msra.mxu0 0.0
        %490 = vmatprep.subr.mxu0 0.0
        %491 = vmatpush1.msra.mxu0 0.0
        %492 = vmatprep.subr.mxu0 0.0
        %493 = vmatpush1.msra.mxu0 0.0
        %494 = vmatprep.subr.mxu0 0.0
        %495 = vmatpush1.msra.mxu0 %v449
        %496 = vmatprep.subr.mxu0 0.0
        %497 = vmatpush1.msra.mxu0 %v448
        %498 = vmatprep.subr.mxu0 0.0
        %499 = vmatpush1.msra.mxu0 %v447
        %500 = vmatprep.subr.mxu0 0.0
        %501 = vmatpush1.msra.mxu0 %v446
        %502 = vmatprep.subr.mxu0 0.0
        %503 = vmatpush2.msra.mxu0 0.0
        %504 = vmatprep.subr.mxu0 0.0
        %505 = vmatpush2.msra.mxu0 0.0
        %506 = vmatprep.subr.mxu0 0.0
        %507 = vmatpush2.msra.mxu0 0.0
        %508 = vmatprep.subr.mxu0 0.0
        %509 = vmatpush2.msra.mxu0 0.0
        %510 = vmatprep.subr.mxu0 0.0
        %511 = vmatpush2.msra.mxu0 0.0
        %512 = vmatprep.subr.mxu0 0.0
        %513 = vmatpush2.msra.mxu0 0.0
        %514 = vmatprep.subr.mxu0 0.0
        %515 = vmatpush2.msra.mxu0 0.0
        %516 = vmatprep.subr.mxu0 0.0
        %517 = vmatpush2.msra.mxu0 0.0
        %518 = vmatprep.subr.mxu0 0.0
        %519 = vmatpush2.msra.mxu0 0.0
        %520 = vmatprep.subr.mxu0 0.0
        %521 = vmatpush2.msra.mxu0 0.0
        %522 = vmatprep.subr.mxu0 0.0
        %523 = vmatpush2.msra.mxu0 0.0
        %524 = vmatprep.subr.mxu0 0.0
        %525 = vmatpush2.msra.mxu0 0.0
        %526 = vmatprep.subr.mxu0 0.0
        %527 = vmatpush2.msra.mxu0 0.0
        %528 = vmatprep.subr.mxu0 0.0
        %529 = vmatpush2.msra.mxu0 0.0
        %530 = vmatprep.subr.mxu0 0.0
        %531 = vmatpush2.msra.mxu0 0.0
        %532 = vmatprep.subr.mxu0 0.0
        %533 = vmatpush2.msra.mxu0 0.0
        %534 = vmatprep.mubr.f32.mxu0 0.0
        %535 = vmatmul.mubr.f32.gmra.mxu0 %v459
        %v536 = vpop.f32.mrf.mxu0
        %v537 = vadd.f32 %v455, %v536
        %v538 = vpop.f32.mrf.mxu0
        %539 = vmatprep.mubr.f32.mxu0 0.0
        %540 = vmatmul.mubr.f32.gmra.mxu0 %v462
        %v541 = vpop.f32.mrf.mxu0
        %v542 = vadd.f32 %v455, %v541
        %v543 = vpop.f32.mrf.mxu0
        %544 = vmatprep.mubr.f32.mxu0 0.0
        %545 = vmatmul.mubr.f32.gmra.mxu0 %v465
        %v546 = vpop.f32.mrf.mxu0
        %v547 = vadd.f32 %v455, %v546
        %v548 = vpop.f32.mrf.mxu0
        %549 = vmatprep.mubr.f32.mxu0 0.0
        %550 = vmatmul.mubr.f32.gmra.mxu0 %v468
        %v551 = vpop.f32.mrf.mxu0
        %v552 = vadd.f32 %v455, %v551
        %v553 = vpop.f32.mrf.mxu0
        %554 = vdwg.mxu0
        %555 = vst [vmem:[%s271] sm:$0xff] %v537
        %556 = vst [vmem:[%s271 + $0x8] sm:$0xff] %v542
        %557 = vst [vmem:[%s271 + $0x10] sm:$0xff] %v547
        %558 = vst [vmem:[%s271 + $0x18] sm:$0xff] %v552
        %s559 = sand.u32 %s126, 1
        %s560 = scalar_lea.sflag [#allocation4], %s559
        %s561 = sand.u32 %s126, 1
        %s562 = smul.addr %s561, 32
        %s563 = scalar_lea.vmem [#allocation8], %s562
        // Predicated region
        $region49: #{tpu_custom_call.1} parent=35 // pred_check
          %p564 = pneg %p136
        $region50: #{tpu_custom_call.1} parent=35 // pred_check_branch
          %566 = sbr.rel (%p564) target = $region52
        $region51: #{tpu_custom_call.1} parent=35 // pred_region
          %s567 = smul.u32 2, %s24
          %s569 = ssub.s32 512, 512
          %570 = vsyncadd %s560, %s569
          %s571 = smul.addr %s567, 2
          %s572 = smul.addr %s571, 128
          %s573 = scalar_lea.hbm %s4, %s572
          %s574 = sshll.u32 %s563, 4
          %s575 = int_to_ptr.vmem [resolvable:$true] %s574
          %580 = dma.vmem_to_hbm [thread:$0]  %s575, 512, %s573, %s560, 128, 128, 8
        $region52: #{tpu_custom_call.1} parent=35 // pred_fallthru
          _
      $region36: #{tpu_custom_call.1} parent=5 // pred_fallthru
        _
      %p581 = scmp.le.s32.totalorder 2, %s19
      // Predicated region
      $region53: #{tpu_custom_call.1} parent=5 // pred_check
        %p582 = pneg %p581
      $region54: #{tpu_custom_call.1} parent=5 // pred_check_branch
        %584 = sbr.rel (%p582) target = $region56
      $region55: #{tpu_custom_call.1} parent=5 // pred_region
        %s585 = ssub.s32 %s19, 2
        // Predicated region
        $region57: #{tpu_custom_call.1} parent=55 // pred_check
          %p586 = pneg %p142
        $region58: #{tpu_custom_call.1} parent=55 // pred_check_branch
          %588 = sbr.rel (%p586) target = $region60
        $region59: #{tpu_custom_call.1} parent=55 // pred_region
          %s589 = sand.u32 %s127, 1
          %s590 = scalar_lea.sflag [#allocation4], %s589
          %s591 = sand.u32 %s127, 1
          %s592 = smul.addr %s591, 32
          %s593 = scalar_lea.vmem [#allocation8], %s592
          %594 = dma.done %s590, 512
        $region60: #{tpu_custom_call.1} parent=55 // pred_fallthru
          _
      $region56: #{tpu_custom_call.1} parent=5 // pred_fallthru
        _
    $region6: #{tpu_custom_call.1} parent=1 // loop_footer
      %s23 = sadd.s32 1, %s19
    $region7: #{tpu_custom_call.1} parent=1 // loop_footer_branch
      %18 = sbr.rel target = $region3
    $region8: #{tpu_custom_call.1} parent=1 // loop_exit
      _
    %595 = vsyncpa [#allocation3], 1
    %s596 = scalar_lea.sflag [#allocation3], 1
    %597 = vsyncpa %s596, 1
    %598 = vsyncpa [#allocation6], 1
    %s599 = scalar_lea.sflag [#allocation6], 1
    %600 = vsyncpa %s599, 1
    %601 = vsyncpa [#allocation4], 1
    %s602 = scalar_lea.sflag [#allocation4], 1
    %603 = vsyncpa %s602, 1

</llo_original>
